<compile_context>
chip_gen: v5e
topology: v5e:2x2
jax: 0.10.0
libtpu: 0.0.40
codegen_flags: <defaults>
</compile_context>

<pallas_src>
import jax
import jax.numpy as jnp
from jax.experimental import pallas as pl
from jax.experimental.pallas import tpu as pltpu


def dist_embed_kernel(dist_ref, center_ref, negexp_ref, out_ref):
    # dist_ref:   (1, TL)        float32  (distance index on lane axis)
    # center_ref: (n_feat, 1)    float32
    # negexp_ref: (n_feat, 1)    float32  (= -|exponent|, precomputed)
    # out_ref:    (n_feat, TL)   out dtype
    d = dist_ref[...]                      # (1, TL)
    c = center_ref[...]                    # (n_feat, 1)
    ne = negexp_ref[...]                   # (n_feat, 1)
    diff = d - c                           # broadcast -> (n_feat, TL)
    out_ref[...] = jnp.exp(ne * diff * diff).astype(out_ref.dtype)


def _round_up(x, m):
    return (x + m - 1) // m * m


def dist_embed(dist, center, exponent, *, block_cols=8192,
               out_dtype=jnp.float32):
    """JAX/Pallas equivalent of DistEmbedLayer.forward.

    dist: any shape; if last dim != 1 it is treated as scalar distances and a
    trailing size-1 axis is added (matches torch unsqueeze(-1) semantics).
    Returns array of shape dist_leading_shape + (n_feat,).

    block_cols: lane-tile width (multiple of 128).  8192 keeps the
    double-buffered working set ~2 MiB (safe on v5e/v6e/v7x) while amortizing
    the ~0.35 us per-grid-step overhead.
    out_dtype: set to jnp.bfloat16 if the consumer tolerates it (halves the
    HBM write traffic of this write-bound kernel); default float32 matches
    the reference module exactly.
    """
    n_feat = center.shape[0]

    # Match the PyTorch unsqueeze logic.
    if dist.ndim >= 1 and dist.shape[-1] == 1:
        lead_shape = dist.shape[:-1]
    else:
        lead_shape = dist.shape

    d_flat = dist.reshape(-1).astype(jnp.float32)
    M = d_flat.shape[0]

    # Lane-dense: choose a lane tile that is a multiple of 128 but never pads
    # a small input up to a huge tile.
    TL = max(128, min(int(block_cols), _round_up(M, 128)))
    TL = _round_up(TL, 128)
    Mp = _round_up(M, TL)
    if Mp != M:
        d_flat = jnp.pad(d_flat, (0, Mp - M))
    d2 = d_flat.reshape(1, Mp)

    c2 = center.reshape(n_feat, 1).astype(jnp.float32)
    # Hoist abs+negate out of the kernel (parameter-sized, done once).
    ne2 = (-jnp.abs(exponent)).reshape(n_feat, 1).astype(jnp.float32)

    out_fm = pl.pallas_call(
        dist_embed_kernel,
        out_shape=jax.ShapeDtypeStruct((n_feat, Mp), out_dtype),
        grid=(Mp // TL,),
        in_specs=[
            pl.BlockSpec((1, TL), lambda i: (0, i)),
            pl.BlockSpec((n_feat, 1), lambda i: (0, 0)),
            pl.BlockSpec((n_feat, 1), lambda i: (0, 0)),
        ],
        out_specs=pl.BlockSpec((n_feat, TL), lambda i: (0, i)),
        compiler_params=pltpu.CompilerParams(
            dimension_semantics=("parallel",)),
    )(d2, c2, ne2)

    # Feature-major -> (..., n_feat).  Slicing the ragged tail fuses into the
    # same XLA transpose (no separate full-output copy).
    out = out_fm[:, :M].T
    return out.reshape(lead_shape + (n_feat,))


def make_params(n_feat, start, end):
    # Deterministic init, exactly as in DistEmbedLayer.__init__.
    center = start + (end - start) / (n_feat - 1) * jnp.arange(
        n_feat, dtype=jnp.float32)
    exponent = 2.0 * jnp.ones((n_feat,), jnp.float32) * n_feat / (end - start)
    return center, exponent


if __name__ == "__main__":
    n_feat = 32
    start, end = 0.0, 5.0
    center, exponent = make_params(n_feat, start, end)

    # Small example: batch=2, seq=8 scalar distances.
    key = jax.random.PRNGKey(0)
    dist = jax.random.uniform(key, (2, 8), jnp.float32,
                              minval=0.0, maxval=5.0)

    out = dist_embed(dist, center, exponent)
    out = jax.block_until_ready(out)

    # Pure-JAX reference (mirrors the torch forward).
    d_ref = dist[..., None]                         # (2, 8, 1)
    ref = jnp.exp(-jnp.abs(exponent)[None, None, :] *
                  (d_ref - center[None, None, :]) ** 2)

    assert out.shape == (2, 8, n_feat), out.shape
    assert jnp.allclose(out, ref, atol=1e-6, rtol=1e-6), \
        float(jnp.max(jnp.abs(out - ref)))

    print("KERNEL_OK")
</pallas_src>

<mosaic_0001>
module attributes {stable_mosaic.version = 11 : i64} {
  func.func @dist_embed_kernel(%arg0: i32, %arg1: memref<1x128xf32, #tpu.memory_space<vmem>>, %arg2: memref<32x1xf32, #tpu.memory_space<vmem>>, %arg3: memref<32x1xf32, #tpu.memory_space<vmem>>, %arg4: memref<32x128xf32, #tpu.memory_space<vmem>>) attributes {dimension_semantics = [#tpu.dimension_semantics<parallel>], iteration_bounds = array<i64: 1>, scalar_prefetch = 0 : i64, scratch_operands = 0 : i64, tpu.core_type = #tpu.core_type<tc>, window_params = [{transform_indices = @transform_0, window_bounds = array<i64: 1, 128>}, {pipeline_mode = #tpu.pipeline_mode<synchronous>, transform_indices = @transform_1, window_bounds = array<i64: 32, 1>}, {pipeline_mode = #tpu.pipeline_mode<synchronous>, transform_indices = @transform_2, window_bounds = array<i64: 32, 1>}, {transform_indices = @transform_3, window_bounds = array<i64: 32, 128>}]} {
    %c0 = arith.constant 0 : index
    %c0_0 = arith.constant 0 : index
    %0 = vector.load %arg1[%c0, %c0_0] : memref<1x128xf32, #tpu.memory_space<vmem>>, vector<1x128xf32>
    %c0_1 = arith.constant 0 : index
    %c0_2 = arith.constant 0 : index
    %1 = vector.load %arg2[%c0_1, %c0_2] : memref<32x1xf32, #tpu.memory_space<vmem>>, vector<32x1xf32>
    %c0_3 = arith.constant 0 : index
    %c0_4 = arith.constant 0 : index
    %2 = vector.load %arg3[%c0_3, %c0_4] : memref<32x1xf32, #tpu.memory_space<vmem>>, vector<32x1xf32>
    %3 = vector.broadcast %0 : vector<1x128xf32> to vector<32x128xf32>
    %4 = vector.broadcast %1 : vector<32x1xf32> to vector<32x128xf32>
    %5 = arith.subf %3, %4 : vector<32x128xf32>
    %6 = vector.broadcast %2 : vector<32x1xf32> to vector<32x128xf32>
    %7 = arith.mulf %6, %5 : vector<32x128xf32>
    %8 = arith.mulf %7, %5 : vector<32x128xf32>
    %9 = math.exp %8 : vector<32x128xf32>
    %c0_5 = arith.constant 0 : index
    %c0_6 = arith.constant 0 : index
    %10 = vector.load %arg4[%c0_5, %c0_6] : memref<32x128xf32, #tpu.memory_space<vmem>>, vector<32x128xf32>
    tpu.vector_store %arg4[%c0_5, %c0_6], %9 {strides = array<i32>} : memref<32x128xf32, #tpu.memory_space<vmem>>, vector<32x128xf32>,
    return
  }
  func.func @transform_0(%arg0: i32) -> (i32, i32) {
    %c0_i32 = arith.constant 0 : i32
    %c0_i32_0 = arith.constant 0 : i32
    return %c0_i32, %arg0 : i32, i32
  }
  func.func @transform_1(%arg0: i32) -> (i32, i32) {
    %c0_i32 = arith.constant 0 : i32
    %c0_i32_0 = arith.constant 0 : i32
    %c0_i32_1 = arith.constant 0 : i32
    return %c0_i32, %c0_i32_0 : i32, i32
  }
  func.func @transform_2(%arg0: i32) -> (i32, i32) {
    %c0_i32 = arith.constant 0 : i32
    %c0_i32_0 = arith.constant 0 : i32
    %c0_i32_1 = arith.constant 0 : i32
    return %c0_i32, %c0_i32_0 : i32, i32
  }
  func.func @transform_3(%arg0: i32) -> (i32, i32) {
    %c0_i32 = arith.constant 0 : i32
    %c0_i32_0 = arith.constant 0 : i32
    return %c0_i32, %arg0 : i32, i32
  }
}

</mosaic_0001>

<llo_original>
// kernel: tpu_custom_call.1
$region0: #{tpu_custom_call.1}
  #allocation0 [shape = 'u32[]', space=smem, size = 0x4, offset = 0x4, fixed_abs, tag = 'smem constant byte address 0x4 - core index']
  #allocation1 [shape = 'u32[72,128]{1,0:T(1,128)}', space=vmem, size = 0x9000, scoped, tag = 'internal scratch']
  %s0 = inlined_call_operand.vmem [shape: f32[1,128], index: 0, kind: input, shape index: {}]
  %s1 = inlined_call_operand.vmem [shape: f32[32,1], index: 1, kind: input, shape index: {}]
  %s2 = inlined_call_operand.vmem [shape: f32[32,1], index: 2, kind: input, shape index: {}]
  %s3 = inlined_call_operand.hbm [shape: f32[32,128], index: 3, kind: output, shape index: {}]
  %s4 = sld [smem:[#allocation0]]
  $region22: #{tpu_custom_call.1} parent=0
    _
  %s6 = ssub.s32 1, %s4
  %s7 = scalar_select 0, %s6, %s4
  $region1: #{tpu_custom_call.1} parent=0
    #allocation2 [shape = 'u8[16384]{0}', space=vmem, size = 0x4000, scoped, tag = 'output window, operand 0, single buffered']
    #allocation3 [shape = 's32[1]{0}', space=sflag, size = 0x4, scoped, tag = 'scoped memory for tpu_custom_call.1']
    %8 = vsyncpa [#allocation3], 0
    // Predicated region
    $region2: #{tpu_custom_call.1} parent=1 // pred_check
      _
    $region3: #{tpu_custom_call.1} parent=1 // pred_check_branch
      %10 = sbr.rel (0) target = $region5
    $region4: #{tpu_custom_call.1} parent=1 // pred_region
      _
    $region5: #{tpu_custom_call.1} parent=1 // pred_fallthru
      _
    // Predicated region
    $region6: #{tpu_custom_call.1} parent=1 // pred_check
      _
    $region7: #{tpu_custom_call.1} parent=1 // pred_check_branch
      %12 = sbr.rel (0) target = $region9
    $region8: #{tpu_custom_call.1} parent=1 // pred_region
      _
    $region9: #{tpu_custom_call.1} parent=1 // pred_fallthru
      _
    // Predicated region
    $region10: #{tpu_custom_call.1} parent=1 // pred_check
      _
    $region11: #{tpu_custom_call.1} parent=1 // pred_check_branch
      %14 = sbr.rel (0) target = $region13
    $region12: #{tpu_custom_call.1} parent=1 // pred_region
      _
    $region13: #{tpu_custom_call.1} parent=1 // pred_fallthru
      _
    %v15 = vld [vmem:[%s0] sm:$0x1]
    %v16 = vld [vmem:[%s1] sm:$0xff]
    %v17 = vld [vmem:[%s1 + $0x8] sm:$0xff]
    %v18 = vld [vmem:[%s1 + $0x10] sm:$0xff]
    %v19 = vld [vmem:[%s1 + $0x18] sm:$0xff]
    %v20 = vld [vmem:[%s2] sm:$0xff]
    %v21 = vld [vmem:[%s2 + $0x8] sm:$0xff]
    %v22 = vld [vmem:[%s2 + $0x10] sm:$0xff]
    %v23 = vld [vmem:[%s2 + $0x18] sm:$0xff]
    %v25 = vperm.slane %v15, 0
    %28 = vset.pattern.permute.xlu0 0
    %29 = vperm.xlu0 %28, %v16
    %v30 = vpop.permute.xlu0 %29
    %33 = vset.pattern.permute.xlu0 0
    %34 = vperm.xlu0 %33, %v17
    %v35 = vpop.permute.xlu0 %34
    %38 = vset.pattern.permute.xlu0 0
    %39 = vperm.xlu0 %38, %v18
    %v40 = vpop.permute.xlu0 %39
    %43 = vset.pattern.permute.xlu0 0
    %44 = vperm.xlu0 %43, %v19
    %v45 = vpop.permute.xlu0 %44
    %v47 = vsub.f32 %v25, %v30
    %v48 = vsub.f32 %v25, %v35
    %v49 = vsub.f32 %v25, %v40
    %v50 = vsub.f32 %v25, %v45
    %52 = vset.pattern.permute.xlu0 0
    %53 = vperm.xlu0 %52, %v20
    %v54 = vpop.permute.xlu0 %53
    %57 = vset.pattern.permute.xlu0 0
    %58 = vperm.xlu0 %57, %v21
    %v59 = vpop.permute.xlu0 %58
    %62 = vset.pattern.permute.xlu0 0
    %63 = vperm.xlu0 %62, %v22
    %v64 = vpop.permute.xlu0 %63
    %67 = vset.pattern.permute.xlu0 0
    %68 = vperm.xlu0 %67, %v23
    %v69 = vpop.permute.xlu0 %68
    %v71 = vmul.f32 %v54, %v47
    %v72 = vmul.f32 %v59, %v48
    %v73 = vmul.f32 %v64, %v49
    %v74 = vmul.f32 %v69, %v50
    %v75 = vmul.f32 %v71, %v47
    %v76 = vmul.f32 %v72, %v48
    %v77 = vmul.f32 %v73, %v49
    %v78 = vmul.f32 %v74, %v50
    %v79 = vmul.f32 %v75, 1.442695
    %v80 = vpow.pop %v79
    %v81 = vmul.f32 %v76, 1.442695
    %v82 = vpow.pop %v81
    %v83 = vmul.f32 %v77, 1.442695
    %v84 = vpow.pop %v83
    %v85 = vmul.f32 %v78, 1.442695
    %v86 = vpow.pop %v85
    %87 = vst [vmem:[#allocation2] sm:$0xff] %v80
    %88 = vst [vmem:[#allocation2 + $0x8] sm:$0xff] %v82
    %89 = vst [vmem:[#allocation2 + $0x10] sm:$0xff] %v84
    %90 = vst [vmem:[#allocation2 + $0x18] sm:$0xff] %v86
    // Predicated region
    $region14: #{tpu_custom_call.1} parent=1 // pred_check
      _
    $region15: #{tpu_custom_call.1} parent=1 // pred_check_branch
      %92 = sbr.rel (0) target = $region17
    $region16: #{tpu_custom_call.1} parent=1 // pred_region
      %94 = vsyncadd [#allocation3], 0
      %s95 = sshll.u32 [#allocation2], 4
      %s96 = int_to_ptr.vmem [resolvable:$true] %s95
      %s97 = sshll.u32 %s3, 4
      %s98 = int_to_ptr.hbm [resolvable:$true] %s97
      %103 = dma.vmem_to_hbm [thread:$0]  %s96, 512, %s98, [#allocation3], 128, 128, 8
    $region17: #{tpu_custom_call.1} parent=1 // pred_fallthru
      _
    // Predicated region
    $region18: #{tpu_custom_call.1} parent=1 // pred_check
      _
    $region19: #{tpu_custom_call.1} parent=1 // pred_check_branch
      %105 = sbr.rel (0) target = $region21
    $region20: #{tpu_custom_call.1} parent=1 // pred_region
      %107 = dma.done [#allocation3], 512
    $region21: #{tpu_custom_call.1} parent=1 // pred_fallthru
      _
    %108 = vsyncpa [#allocation3], 1

</llo_original>
